<compile_context>
chip_gen: v7x
topology: tpu7x:2x2x1
jax: 0.10.0
libtpu: 0.0.40
codegen_flags: <defaults>
</compile_context>

<pallas_src>
import functools

import jax
import jax.numpy as jnp
from jax.experimental import pallas as pl
from jax.experimental.pallas import tpu as pltpu


def _mlp_kernel(x_ref, wg_ref, bg_ref, wu_ref, bu_ref, wd_ref, bd_ref, o_ref):
    """One grid step = one (core-split, layer, I-tile) slice, accumulated into o_ref."""
    core = pl.program_id(0)
    layer = pl.program_id(1)
    itile = pl.program_id(2)

    # Zero this core's resident output block at the start of its work.
    @pl.when((layer == 0) & (itile == 0))
    def _():
        o_ref[...] = jnp.zeros_like(o_ref)

    x = x_ref[0]                                   # (B, H)   f32
    wg = wg_ref[0]                                 # (H, TI)  f32 or bf16
    wu = wu_ref[0]                                 # (H, TI)
    wd = wd_ref[0]                                 # (TI, H)

    # f32 accumulation regardless of weight dtype.  Activations stay f32; for
    # bf16 weights jnp.dot promotes the weight tile (memory-bound kernel, so
    # the MXU input dtype does not matter -- only streamed HBM bytes do).
    # TODO(synk): qint8 branch of mlp_torch (per-tensor quant/dequant) is not
    # implemented; an int8/fp8 weight path would add per-tile scales here.
    gate = jnp.dot(x, wg, preferred_element_type=jnp.float32) + bg_ref[0]   # (B, TI)
    up = jnp.dot(x, wu, preferred_element_type=jnp.float32) + bu_ref[0]     # (B, TI)

    # Exact SiLU, matching torch's act_fn:  x / (1 + exp(-x)).
    inter = gate / (1.0 + jnp.exp(-gate)) * up                              # (B, TI)

    # Partial down-projection for this I-tile, accumulated in f32.
    o_ref[...] += jnp.dot(inter, wd, preferred_element_type=jnp.float32)[None]  # (1,B,H)

    # Down-proj bias: add exactly once per layer (first I-tile, core 0).
    @pl.when((core == 0) & (itile == 0))
    def _():
        o_ref[...] += bd_ref[...]                  # (1,1,H) broadcasts to (1,B,H)


def _device_kind():
    try:
        return jax.devices()[0].device_kind.lower()
    except Exception:
        return ""


def _default_core_splits():
    # Two TensorCores per chip only on v7x-class devices; on single-TC chips a
    # core split is just a serial outer loop (pure overhead).
    return 2 if "v7" in _device_kind() else 1


def _default_block_i(weight_itemsize):
    if "v7" in _device_kind():                       # 64 MiB VMEM per TC
        return 256 if weight_itemsize >= 4 else 512
    return 512 if weight_itemsize >= 4 else 1024     # 128 MiB VMEM (v5e/v6e)


def _default_vmem_limit():
    # Leave headroom below physical VMEM for compiler scratch / semaphores.
    return (56 if "v7" in _device_kind() else 96) * 1024 * 1024


def _pick_tile(intermediate, block_i):
    """Largest 128-multiple divisor of `intermediate` that is <= block_i."""
    if intermediate % 128 == 0 and block_i >= 128:
        ti = min(block_i, intermediate)
        ti -= ti % 128
        while ti >= 128 and intermediate % ti != 0:
            ti -= 128
        if ti >= 128:
            return ti
    return intermediate      # tiny / ragged shapes: single tile


@functools.partial(
    jax.jit, static_argnames=("block_i", "num_core_splits", "vmem_limit_bytes"))
def simple_mlp_forward(x, wg, bg, wu, bu, wd, bd, *,
                       block_i=None, num_core_splits=None,
                       vmem_limit_bytes=None):
    """
    x : (L, B, H) f32.   wg/wu : (L, H, I), wd : (L, I, H) in f32 or bf16.
    bg/bu : (L, 1, I),   bd : (L, 1, H).
    Returns (B, H) f32 = sum over layers of down(silu(gate(x_l)) * up(x_l)).
    """
    L, B, H = x.shape
    I = wg.shape[2]

    w_itemsize = jnp.dtype(wg.dtype).itemsize
    if block_i is None:
        block_i = _default_block_i(w_itemsize)
    if num_core_splits is None:
        num_core_splits = _default_core_splits()
    if vmem_limit_bytes is None:
        vmem_limit_bytes = _default_vmem_limit()

    # Tile the intermediate dim (lane-aligned divisor of I).
    ti = _pick_tile(I, block_i)
    nti = I // ti

    # Split the I-tile stream across TensorCores (v7x megacore only).
    nc = num_core_splits if (num_core_splits > 0 and nti % num_core_splits == 0) else 1
    ntc = nti // nc

    grid = (nc, L, ntc)

    grid_spec = pltpu.PrefetchScalarGridSpec(
        num_scalar_prefetch=0,
        grid=grid,
        in_specs=[
            # x: reused across all I-tiles of a layer (index map ignores c, j).
            pl.BlockSpec((1, B, H), lambda c, l, j: (l, 0, 0)),
            # gate / up weight + bias tiles: disjoint per (core, I-tile).
            pl.BlockSpec((1, H, ti), lambda c, l, j: (l, 0, c * ntc + j)),
            pl.BlockSpec((1, 1, ti), lambda c, l, j: (l, 0, c * ntc + j)),
            pl.BlockSpec((1, H, ti), lambda c, l, j: (l, 0, c * ntc + j)),
            pl.BlockSpec((1, 1, ti), lambda c, l, j: (l, 0, c * ntc + j)),
            # down weight tile.
            pl.BlockSpec((1, ti, H), lambda c, l, j: (l, c * ntc + j, 0)),
            # down bias: fetched once per layer.
            pl.BlockSpec((1, 1, H), lambda c, l, j: (l, 0, 0)),
        ],
        # One resident partial-output block per core; revisited across (l, j).
        out_specs=pl.BlockSpec((1, B, H), lambda c, l, j: (c, 0, 0)),
    )

    weight_bytes = (wg.size + wu.size + wd.size) * w_itemsize
    other_bytes = (x.size * x.dtype.itemsize
                   + (bg.size + bu.size) * bg.dtype.itemsize
                   + bd.size * bd.dtype.itemsize
                   + nc * B * H * 4)
    cost = pl.CostEstimate(
        flops=6 * B * H * I * L,
        transcendentals=B * I * L,
        bytes_accessed=int(weight_bytes + other_bytes),
    )

    partials = pl.pallas_call(
        _mlp_kernel,
        out_shape=jax.ShapeDtypeStruct((nc, B, H), jnp.float32),
        grid_spec=grid_spec,
        compiler_params=pltpu.CompilerParams(
            dimension_semantics=("parallel", "arbitrary", "arbitrary"),
            vmem_limit_bytes=vmem_limit_bytes,
        ),
        cost_estimate=cost,
    )(x, wg, bg, wu, bu, wd, bd)

    return partials.sum(axis=0) if nc > 1 else partials[0]


def _reference(x, wg, bg, wu, bu, wd, bd):
    """Pure-JAX reference mirroring the torch module (exact SiLU)."""
    def one_layer(xl, wgl, bgl, wul, bul, wdl, bdl):
        gate = xl @ wgl + bgl
        up = xl @ wul + bul
        inter = gate / (1.0 + jnp.exp(-gate)) * up
        return inter @ wdl + bdl
    outs = jax.vmap(one_layer)(x, wg, bg, wu, bu, wd, bd)   # (L, B, H)
    return outs.sum(axis=0)


if __name__ == "__main__":
    # Small shapes consistent with the module (bench uses hidden=5120,
    # intermediate=3072, layer_num=10; scaled down, same structure).
    layer_num = 3
    batch = 8
    hidden_size = 256
    intermediate_size = 512

    key = jax.random.PRNGKey(0)
    ks = jax.random.split(key, 7)

    x = jax.random.normal(ks[0], (layer_num, batch, hidden_size), jnp.float32)
    # Weights stored [in, out] (== torch weight [out, in] transposed).
    wg = jax.random.normal(ks[1], (layer_num, hidden_size, intermediate_size), jnp.float32) * 0.05
    wu = jax.random.normal(ks[2], (layer_num, hidden_size, intermediate_size), jnp.float32) * 0.05
    wd = jax.random.normal(ks[3], (layer_num, intermediate_size, hidden_size), jnp.float32) * 0.05
    bg = jax.random.normal(ks[4], (layer_num, 1, intermediate_size), jnp.float32) * 0.01
    bu = jax.random.normal(ks[5], (layer_num, 1, intermediate_size), jnp.float32) * 0.01
    bd = jax.random.normal(ks[6], (layer_num, 1, hidden_size), jnp.float32) * 0.01

    ref = _reference(x, wg, bg, wu, bu, wd, bd)

    # f32 weights (exact-math path; block_i=256 forces >1 I-tile so the
    # in-VMEM accumulation across tiles is exercised even at demo shapes).
    out = simple_mlp_forward(x, wg, bg, wu, bu, wd, bd, block_i=256)
    out = jax.block_until_ready(out)
    assert out.shape == (batch, hidden_size)
    assert jnp.allclose(out, ref, atol=1e-4, rtol=1e-4), "f32 mismatch vs reference"

    # bf16 weights: the main perf lever (halves streamed HBM bytes on this
    # bandwidth-bound kernel); f32 accumulation is kept inside the kernel.
    out_bf16 = simple_mlp_forward(
        x,
        wg.astype(jnp.bfloat16), bg,
        wu.astype(jnp.bfloat16), bu,
        wd.astype(jnp.bfloat16), bd)
    out_bf16 = jax.block_until_ready(out_bf16)
    assert jnp.allclose(out_bf16, ref, atol=5e-2, rtol=5e-2), "bf16 mismatch vs reference"

    print("KERNEL_OK")
</pallas_src>

<mosaic_0001>
module attributes {stable_mosaic.version = 11 : i64} {
  func.func @_mlp_kernel(%arg0: i32, %arg1: i32, %arg2: i32, %arg3: memref<1x8x256xf32, #tpu.memory_space<vmem>>, %arg4: memref<1x256x256xf32, #tpu.memory_space<vmem>>, %arg5: memref<1x1x256xf32, #tpu.memory_space<vmem>>, %arg6: memref<1x256x256xf32, #tpu.memory_space<vmem>>, %arg7: memref<1x1x256xf32, #tpu.memory_space<vmem>>, %arg8: memref<1x256x256xf32, #tpu.memory_space<vmem>>, %arg9: memref<1x1x256xf32, #tpu.memory_space<vmem>>, %arg10: memref<1x8x256xf32, #tpu.memory_space<vmem>>) attributes {dimension_semantics = [#tpu.dimension_semantics<parallel>, #tpu.dimension_semantics<arbitrary>, #tpu.dimension_semantics<arbitrary>], iteration_bounds = array<i64: 1, 3, 2>, scalar_prefetch = 0 : i64, scratch_operands = 0 : i64, tpu.core_type = #tpu.core_type<tc>, window_params = [{transform_indices = @transform_0, window_bounds = array<i64: 1, 8, 256>}, {transform_indices = @transform_1, window_bounds = array<i64: 1, 256, 256>}, {transform_indices = @transform_2, window_bounds = array<i64: 1, 1, 256>}, {transform_indices = @transform_3, window_bounds = array<i64: 1, 256, 256>}, {transform_indices = @transform_4, window_bounds = array<i64: 1, 1, 256>}, {transform_indices = @transform_5, window_bounds = array<i64: 1, 256, 256>}, {transform_indices = @transform_6, window_bounds = array<i64: 1, 1, 256>}, {transform_indices = @transform_7, window_bounds = array<i64: 1, 8, 256>}]} {
    %c0_i32 = arith.constant 0 : i32
    %0 = arith.cmpi eq, %arg1, %c0_i32 : i32
    %c0_i32_0 = arith.constant 0 : i32
    %1 = arith.cmpi eq, %arg2, %c0_i32_0 : i32
    %2 = arith.andi %0, %1 : i1
    %3 = arith.extui %2 : i1 to i32
    %c0_i32_1 = arith.constant 0 : i32
    %4 = arith.cmpi ne, %3, %c0_i32_1 : i32
    scf.if %4 {
      %cst_32 = arith.constant 0.000000e+00 : f32
      %40 = vector.broadcast %cst_32 : f32 to vector<1x8x256xf32>
      %c0_33 = arith.constant 0 : index
      %c0_34 = arith.constant 0 : index
      %c0_35 = arith.constant 0 : index
      %41 = vector.load %arg10[%c0_33, %c0_34, %c0_35] : memref<1x8x256xf32, #tpu.memory_space<vmem>>, vector<1x8x256xf32>
      tpu.vector_store %arg10[%c0_33, %c0_34, %c0_35], %40 {strides = array<i32>} : memref<1x8x256xf32, #tpu.memory_space<vmem>>, vector<1x8x256xf32>,
    } else {
    }
    %c0 = arith.constant 0 : index
    %c0_2 = arith.constant 0 : index
    %c0_3 = arith.constant 0 : index
    %5 = vector.load %arg3[%c0, %c0_2, %c0_3] : memref<1x8x256xf32, #tpu.memory_space<vmem>>, vector<1x8x256xf32>
    %6 = vector.shape_cast %5 : vector<1x8x256xf32> to vector<8x256xf32>
    %c0_4 = arith.constant 0 : index
    %c0_5 = arith.constant 0 : index
    %c0_6 = arith.constant 0 : index
    %7 = vector.load %arg4[%c0_4, %c0_5, %c0_6] : memref<1x256x256xf32, #tpu.memory_space<vmem>>, vector<1x256x256xf32>
    %8 = vector.shape_cast %7 : vector<1x256x256xf32> to vector<256x256xf32>
    %c0_7 = arith.constant 0 : index
    %c0_8 = arith.constant 0 : index
    %c0_9 = arith.constant 0 : index
    %9 = vector.load %arg6[%c0_7, %c0_8, %c0_9] : memref<1x256x256xf32, #tpu.memory_space<vmem>>, vector<1x256x256xf32>
    %10 = vector.shape_cast %9 : vector<1x256x256xf32> to vector<256x256xf32>
    %c0_10 = arith.constant 0 : index
    %c0_11 = arith.constant 0 : index
    %c0_12 = arith.constant 0 : index
    %11 = vector.load %arg8[%c0_10, %c0_11, %c0_12] : memref<1x256x256xf32, #tpu.memory_space<vmem>>, vector<1x256x256xf32>
    %12 = vector.shape_cast %11 : vector<1x256x256xf32> to vector<256x256xf32>
    %cst = arith.constant dense<0.000000e+00> : vector<8x256xf32>
    %13 = tpu.matmul %6, %8, %cst {dimension_numbers = #tpu.dot_dimension_numbers<[1], [0], [0], [1], [0, 0, 1, 1], [], []>} : vector<8x256xf32>, vector<256x256xf32>, vector<8x256xf32> -> vector<8x256xf32>
    %c0_13 = arith.constant 0 : index
    %c0_14 = arith.constant 0 : index
    %c0_15 = arith.constant 0 : index
    %14 = vector.load %arg5[%c0_13, %c0_14, %c0_15] : memref<1x1x256xf32, #tpu.memory_space<vmem>>, vector<1x1x256xf32>
    %15 = vector.shape_cast %14 : vector<1x1x256xf32> to vector<1x256xf32>
    %16 = vector.broadcast %15 : vector<1x256xf32> to vector<8x256xf32>
    %17 = arith.addf %13, %16 : vector<8x256xf32>
    %cst_16 = arith.constant dense<0.000000e+00> : vector<8x256xf32>
    %18 = tpu.matmul %6, %10, %cst_16 {dimension_numbers = #tpu.dot_dimension_numbers<[1], [0], [0], [1], [0, 0, 1, 1], [], []>} : vector<8x256xf32>, vector<256x256xf32>, vector<8x256xf32> -> vector<8x256xf32>
    %c0_17 = arith.constant 0 : index
    %c0_18 = arith.constant 0 : index
    %c0_19 = arith.constant 0 : index
    %19 = vector.load %arg7[%c0_17, %c0_18, %c0_19] : memref<1x1x256xf32, #tpu.memory_space<vmem>>, vector<1x1x256xf32>
    %20 = vector.shape_cast %19 : vector<1x1x256xf32> to vector<1x256xf32>
    %21 = vector.broadcast %20 : vector<1x256xf32> to vector<8x256xf32>
    %22 = arith.addf %18, %21 : vector<8x256xf32>
    %cst_20 = arith.constant 0.000000e+00 : f32
    %23 = vector.broadcast %cst_20 : f32 to vector<8x256xf32>
    %24 = arith.subf %23, %17 : vector<8x256xf32>
    %25 = math.exp %24 : vector<8x256xf32>
    %cst_21 = arith.constant 1.000000e+00 : f32
    %26 = vector.broadcast %cst_21 : f32 to vector<8x256xf32>
    %27 = arith.addf %26, %25 : vector<8x256xf32>
    %28 = arith.divf %17, %27 : vector<8x256xf32>
    %29 = arith.mulf %28, %22 : vector<8x256xf32>
    %c0_22 = arith.constant 0 : index
    %c0_23 = arith.constant 0 : index
    %c0_24 = arith.constant 0 : index
    %30 = vector.load %arg10[%c0_22, %c0_23, %c0_24] : memref<1x8x256xf32, #tpu.memory_space<vmem>>, vector<1x8x256xf32>
    %cst_25 = arith.constant dense<0.000000e+00> : vector<8x256xf32>
    %31 = tpu.matmul %29, %12, %cst_25 {dimension_numbers = #tpu.dot_dimension_numbers<[1], [0], [0], [1], [0, 0, 1, 1], [], []>} : vector<8x256xf32>, vector<256x256xf32>, vector<8x256xf32> -> vector<8x256xf32>
    %32 = vector.shape_cast %31 : vector<8x256xf32> to vector<1x8x256xf32>
    %33 = arith.addf %30, %32 : vector<1x8x256xf32>
    %c0_26 = arith.constant 0 : index
    %c0_27 = arith.constant 0 : index
    %c0_28 = arith.constant 0 : index
    %34 = vector.load %arg10[%c0_26, %c0_27, %c0_28] : memref<1x8x256xf32, #tpu.memory_space<vmem>>, vector<1x8x256xf32>
    tpu.vector_store %arg10[%c0_26, %c0_27, %c0_28], %33 {strides = array<i32>} : memref<1x8x256xf32, #tpu.memory_space<vmem>>, vector<1x8x256xf32>,
    %c0_i32_29 = arith.constant 0 : i32
    %35 = arith.cmpi eq, %arg0, %c0_i32_29 : i32
    %c0_i32_30 = arith.constant 0 : i32
    %36 = arith.cmpi eq, %arg2, %c0_i32_30 : i32
    %37 = arith.andi %35, %36 : i1
    %38 = arith.extui %37 : i1 to i32
    %c0_i32_31 = arith.constant 0 : i32
    %39 = arith.cmpi ne, %38, %c0_i32_31 : i32
    scf.if %39 {
      %c0_32 = arith.constant 0 : index
      %c0_33 = arith.constant 0 : index
      %c0_34 = arith.constant 0 : index
      %40 = vector.load %arg10[%c0_32, %c0_33, %c0_34] : memref<1x8x256xf32, #tpu.memory_space<vmem>>, vector<1x8x256xf32>
      %c0_35 = arith.constant 0 : index
      %c0_36 = arith.constant 0 : index
      %c0_37 = arith.constant 0 : index
      %41 = vector.load %arg9[%c0_35, %c0_36, %c0_37] : memref<1x1x256xf32, #tpu.memory_space<vmem>>, vector<1x1x256xf32>
      %42 = vector.broadcast %41 : vector<1x1x256xf32> to vector<1x8x256xf32>
      %43 = arith.addf %40, %42 : vector<1x8x256xf32>
      %c0_38 = arith.constant 0 : index
      %c0_39 = arith.constant 0 : index
      %c0_40 = arith.constant 0 : index
      %44 = vector.load %arg10[%c0_38, %c0_39, %c0_40] : memref<1x8x256xf32, #tpu.memory_space<vmem>>, vector<1x8x256xf32>
      tpu.vector_store %arg10[%c0_38, %c0_39, %c0_40], %43 {strides = array<i32>} : memref<1x8x256xf32, #tpu.memory_space<vmem>>, vector<1x8x256xf32>,
    } else {
    }
    return
  }
  func.func @transform_0(%arg0: i32, %arg1: i32, %arg2: i32) -> (i32, i32, i32) {
    %c0_i32 = arith.constant 0 : i32
    %c0_i32_0 = arith.constant 0 : i32
    %c0_i32_1 = arith.constant 0 : i32
    return %arg1, %c0_i32, %c0_i32_0 : i32, i32, i32
  }
  func.func @transform_1(%arg0: i32, %arg1: i32, %arg2: i32) -> (i32, i32, i32) {
    %c2_i32 = arith.constant 2 : i32
    %0 = arith.muli %arg0, %c2_i32 : i32
    %1 = arith.addi %0, %arg2 : i32
    %c0_i32 = arith.constant 0 : i32
    %c0_i32_0 = arith.constant 0 : i32
    return %arg1, %c0_i32, %1 : i32, i32, i32
  }
  func.func @transform_2(%arg0: i32, %arg1: i32, %arg2: i32) -> (i32, i32, i32) {
    %c2_i32 = arith.constant 2 : i32
    %0 = arith.muli %arg0, %c2_i32 : i32
    %1 = arith.addi %0, %arg2 : i32
    %c0_i32 = arith.constant 0 : i32
    %c0_i32_0 = arith.constant 0 : i32
    return %arg1, %c0_i32, %1 : i32, i32, i32
  }
  func.func @transform_3(%arg0: i32, %arg1: i32, %arg2: i32) -> (i32, i32, i32) {
    %c2_i32 = arith.constant 2 : i32
    %0 = arith.muli %arg0, %c2_i32 : i32
    %1 = arith.addi %0, %arg2 : i32
    %c0_i32 = arith.constant 0 : i32
    %c0_i32_0 = arith.constant 0 : i32
    return %arg1, %c0_i32, %1 : i32, i32, i32
  }
  func.func @transform_4(%arg0: i32, %arg1: i32, %arg2: i32) -> (i32, i32, i32) {
    %c2_i32 = arith.constant 2 : i32
    %0 = arith.muli %arg0, %c2_i32 : i32
    %1 = arith.addi %0, %arg2 : i32
    %c0_i32 = arith.constant 0 : i32
    %c0_i32_0 = arith.constant 0 : i32
    return %arg1, %c0_i32, %1 : i32, i32, i32
  }
  func.func @transform_5(%arg0: i32, %arg1: i32, %arg2: i32) -> (i32, i32, i32) {
    %c2_i32 = arith.constant 2 : i32
    %0 = arith.muli %arg0, %c2_i32 : i32
    %1 = arith.addi %0, %arg2 : i32
    %c0_i32 = arith.constant 0 : i32
    %c0_i32_0 = arith.constant 0 : i32
    return %arg1, %1, %c0_i32 : i32, i32, i32
  }
  func.func @transform_6(%arg0: i32, %arg1: i32, %arg2: i32) -> (i32, i32, i32) {
    %c0_i32 = arith.constant 0 : i32
    %c0_i32_0 = arith.constant 0 : i32
    %c0_i32_1 = arith.constant 0 : i32
    return %arg1, %c0_i32, %c0_i32_0 : i32, i32, i32
  }
  func.func @transform_7(%arg0: i32, %arg1: i32, %arg2: i32) -> (i32, i32, i32) {
    %c0_i32 = arith.constant 0 : i32
    %c0_i32_0 = arith.constant 0 : i32
    %c0_i32_1 = arith.constant 0 : i32
    return %arg0, %c0_i32, %c0_i32_0 : i32, i32, i32
  }
}

</mosaic_0001>

<llo_original>
// kernel: simple_mlp_forward.1
$region0: #{simple_mlp_forward.1}
  #allocation0 [shape = 'u32[]', space=smem, size = 0x4, offset = 0x4, fixed_abs, tag = 'smem constant byte address 0x4 - core index']
  #allocation1 [shape = 'u32[144,128]{1,0:T(1,128)}', space=vmem, size = 0x12000, scoped, tag = 'internal scratch']
  %s0 = inlined_call_operand.hbm [shape: f32[3,8,256], index: 0, kind: input, shape index: {}]
  %s1 = inlined_call_operand.hbm [shape: f32[3,256,512], index: 1, kind: input, shape index: {}]
  %s2 = inlined_call_operand.hbm [shape: f32[3,1,512], index: 2, kind: input, shape index: {}]
  %s3 = inlined_call_operand.hbm [shape: f32[3,256,512], index: 3, kind: input, shape index: {}]
  %s4 = inlined_call_operand.hbm [shape: f32[3,1,512], index: 4, kind: input, shape index: {}]
  %s5 = inlined_call_operand.hbm [shape: f32[3,512,256], index: 5, kind: input, shape index: {}]
  %s6 = inlined_call_operand.hbm [shape: f32[3,1,256], index: 6, kind: input, shape index: {}]
  %s7 = inlined_call_operand.hbm [shape: f32[1,8,256], index: 7, kind: output, shape index: {}]
  %s8 = sld [smem:[#allocation0]]
  $region97: #{simple_mlp_forward.1} parent=0
    _
  %s10 = ssub.s32 1, %s8
  %s11 = scalar_select 0, %s10, %s8
  $region1: #{simple_mlp_forward.1} parent=0
    #allocation2 [shape = 'u8[16384]{0}', space=vmem, size = 0x4000, scoped, tag = 'input window, operand 0']
    #allocation3 [shape = 's32[2]{0}', space=sflag, size = 0x8, scoped, tag = 'scoped memory for simple_mlp_forward.1']
    #allocation4 [shape = 's32[2]{0}', space=sflag, size = 0x8, scoped, tag = 'scoped memory for simple_mlp_forward.1']
    #allocation5 [shape = 'u8[524288]{0}', space=vmem, size = 0x80000, scoped, tag = 'input window, operand 1']
    #allocation6 [shape = 's32[2]{0}', space=sflag, size = 0x8, scoped, tag = 'scoped memory for simple_mlp_forward.1']
    #allocation7 [shape = 'u8[2048]{0}', space=vmem, size = 0x800, scoped, tag = 'input window, operand 2']
    #allocation8 [shape = 'u8[524288]{0}', space=vmem, size = 0x80000, scoped, tag = 'input window, operand 3']
    #allocation9 [shape = 's32[2]{0}', space=sflag, size = 0x8, scoped, tag = 'scoped memory for simple_mlp_forward.1']
    #allocation10 [shape = 'u8[2048]{0}', space=vmem, size = 0x800, scoped, tag = 'input window, operand 4']
    #allocation11 [shape = 'u8[524288]{0}', space=vmem, size = 0x80000, scoped, tag = 'input window, operand 5']
    #allocation12 [shape = 's32[2]{0}', space=sflag, size = 0x8, scoped, tag = 'scoped memory for simple_mlp_forward.1']
    #allocation13 [shape = 'u8[2048]{0}', space=vmem, size = 0x800, scoped, tag = 'input window, operand 6']
    #allocation14 [shape = 'u8[8192]{0}', space=vmem, size = 0x2000, scoped, tag = 'output window, operand 0, single buffered']
    %12 = vsyncpa [#allocation3], 0
    %s13 = scalar_lea.sflag [#allocation3], 1
    %14 = vsyncpa %s13, 0
    %15 = vsyncpa [#allocation6], 0
    %s16 = scalar_lea.sflag [#allocation6], 1
    %17 = vsyncpa %s16, 0
    %18 = vsyncpa [#allocation9], 0
    %s19 = scalar_lea.sflag [#allocation9], 1
    %20 = vsyncpa %s19, 0
    %21 = vsyncpa [#allocation12], 0
    %s22 = scalar_lea.sflag [#allocation12], 1
    %23 = vsyncpa %s22, 0
    %24 = vsyncpa [#allocation4], 0
    loop: start=0, step=1, limit=8
    $region2: #{simple_mlp_forward.1} parent=1 // loop_pre_header
      _
    $region3: #{simple_mlp_forward.1} parent=1 // loop_header
      %s26 = sphi 0, %s30
      %p27 = scmp.ge.s32.totalorder %s26, 8
      %s33 = sphi 0, %s52
      %s34 = sphi 0, %s48
      %s35 = sphi 0, %s44
      %s36 = sphi 0, %s33
      %s37 = sphi 0, %s34
      %s38 = sphi 0, %s35
      %s39 = sphi 0, %s36
      %s40 = sphi 0, %s37
      %s41 = sphi 0, %s38
      %s55 = sphi 0, %s57
      %s58 = sphi 0, %s55
      %s59 = sphi 0, %s58
      %s75 = sphi 0, %s59
      %s87 = sphi 0, %s89
      %s90 = sphi 0, %s87
      %s91 = sphi 0, %s90
      %s107 = sphi 0, %s91
      %s119 = sphi 0, %s121
      %s122 = sphi 0, %s119
      %s123 = sphi 0, %s122
      %s139 = sphi 0, %s123
      %s151 = sphi 0, %s153
      %s154 = sphi 0, %s151
      %s155 = sphi 0, %s154
      %s171 = sphi 0, %s155
      %s183 = sphi 0, %s185
      %s186 = sphi 0, %s183
      %s187 = sphi 0, %s186
      %s203 = sphi 0, %s187
      %s215 = sphi 0, %s217
      %s218 = sphi 0, %s215
      %s219 = sphi 0, %s218
      %s235 = sphi 0, %s219
      %s241 = sphi 0, %s243
      %s244 = sphi 0, %s241
      %s245 = sphi 0, %s244
      %s261 = sphi 0, %s245
      %s267 = sphi 0, %s269
      %s270 = sphi 0, %s267
      %s271 = sphi 0, %s270
      %s287 = sphi 0, %s271
    $region4: #{simple_mlp_forward.1} parent=1 // loop_header_branch
      %29 = sbr.rel (%p27) target = $region8
    $region5: #{simple_mlp_forward.1} parent=1 // loop_body
      %s31 = ssub.s32 %s26, 1
      %s32 = ssub.s32 %s26, 2
      %s42 = sadd.s32 1, %s35
      %p43 = scmp.ge.s32.totalorder %s42, 2
      %s44 = scalar_select %p43, 0, %s42
      %s45 = sadd.s32 1, %s34
      %s46 = scalar_select %p43, %s45, %s34
      %p47 = scmp.ge.s32.totalorder %s46, 3
      %s48 = scalar_select %p47, 0, %s46
      %s49 = sadd.s32 1, %s33
      %s50 = scalar_select %p47, %s49, %s33
      %p51 = scmp.ge.s32.totalorder %s50, 1
      %s52 = scalar_select %p51, 0, %s50
      %s53 = ssub.s32 %s34, %s48
      %p54 = scmp.eq.s32.totalorder %s53, 0
      %s56 = sadd.s32 %s55, 1
      %s57 = scalar_select %p54, %s55, %s56
      %p60 = pneg %p54
      %p61 = scmp.eq.s32.totalorder %s26, 5
      %p62 = por %p60, %p61
      %p63 = scmp.ne.s32.totalorder %s55, %s58
      %p64 = scmp.eq.s32.totalorder %s26, 0
      %p65 = por %p63, %p64
      %p66 = scmp.ne.s32.totalorder %s55, %s58
      %p67 = scmp.eq.s32.totalorder %s31, 5
      %p68 = por %p66, %p67
      %p69 = scmp.ne.s32.totalorder %s58, %s59
      %p70 = scmp.eq.s32.totalorder %s31, 0
      %p71 = por %p69, %p70
      %p72 = scmp.ne.s32.totalorder %s58, %s59
      %p73 = scmp.eq.s32.totalorder %s32, 5
      %p74 = por %p72, %p73
      %p76 = scmp.ne.s32.totalorder %s59, %s75
      %p77 = scmp.eq.s32.totalorder %s32, 0
      %p78 = por %p76, %p77
      %s79 = smul.u32 %s33, 2
      %s80 = sadd.s32 %s79, %s35
      %s81 = smul.u32 %s52, 2
      %s82 = sadd.s32 %s81, %s44
      %s83 = ssub.s32 %s34, %s48
      %s84 = ssub.s32 %s80, %s82
      %s85 = sor.u32 %s83, %s84
      %p86 = scmp.eq.s32.totalorder %s85, 0
      %s88 = sadd.s32 %s87, 1
      %s89 = scalar_select %p86, %s87, %s88
      %p92 = pneg %p86
      %p93 = scmp.eq.s32.totalorder %s26, 5
      %p94 = por %p92, %p93
      %p95 = scmp.ne.s32.totalorder %s87, %s90
      %p96 = scmp.eq.s32.totalorder %s26, 0
      %p97 = por %p95, %p96
      %p98 = scmp.ne.s32.totalorder %s87, %s90
      %p99 = scmp.eq.s32.totalorder %s31, 5
      %p100 = por %p98, %p99
      %p101 = scmp.ne.s32.totalorder %s90, %s91
      %p102 = scmp.eq.s32.totalorder %s31, 0
      %p103 = por %p101, %p102
      %p104 = scmp.ne.s32.totalorder %s90, %s91
      %p105 = scmp.eq.s32.totalorder %s32, 5
      %p106 = por %p104, %p105
      %p108 = scmp.ne.s32.totalorder %s91, %s107
      %p109 = scmp.eq.s32.totalorder %s32, 0
      %p110 = por %p108, %p109
      %s111 = smul.u32 %s33, 2
      %s112 = sadd.s32 %s111, %s35
      %s113 = smul.u32 %s52, 2
      %s114 = sadd.s32 %s113, %s44
      %s115 = ssub.s32 %s34, %s48
      %s116 = ssub.s32 %s112, %s114
      %s117 = sor.u32 %s115, %s116
      %p118 = scmp.eq.s32.totalorder %s117, 0
      %s120 = sadd.s32 %s119, 1
      %s121 = scalar_select %p118, %s119, %s120
      %p124 = pneg %p118
      %p125 = scmp.eq.s32.totalorder %s26, 5
      %p126 = por %p124, %p125
      %p127 = scmp.ne.s32.totalorder %s119, %s122
      %p128 = scmp.eq.s32.totalorder %s26, 0
      %p129 = por %p127, %p128
      %p130 = scmp.ne.s32.totalorder %s119, %s122
      %p131 = scmp.eq.s32.totalorder %s31, 5
      %p132 = por %p130, %p131
      %p133 = scmp.ne.s32.totalorder %s122, %s123
      %p134 = scmp.eq.s32.totalorder %s31, 0
      %p135 = por %p133, %p134
      %p136 = scmp.ne.s32.totalorder %s122, %s123
      %p137 = scmp.eq.s32.totalorder %s32, 5
      %p138 = por %p136, %p137
      %p140 = scmp.ne.s32.totalorder %s123, %s139
      %p141 = scmp.eq.s32.totalorder %s32, 0
      %p142 = por %p140, %p141
      %s143 = smul.u32 %s33, 2
      %s144 = sadd.s32 %s143, %s35
      %s145 = smul.u32 %s52, 2
      %s146 = sadd.s32 %s145, %s44
      %s147 = ssub.s32 %s34, %s48
      %s148 = ssub.s32 %s144, %s146
      %s149 = sor.u32 %s147, %s148
      %p150 = scmp.eq.s32.totalorder %s149, 0
      %s152 = sadd.s32 %s151, 1
      %s153 = scalar_select %p150, %s151, %s152
      %p156 = pneg %p150
      %p157 = scmp.eq.s32.totalorder %s26, 5
      %p158 = por %p156, %p157
      %p159 = scmp.ne.s32.totalorder %s151, %s154
      %p160 = scmp.eq.s32.totalorder %s26, 0
      %p161 = por %p159, %p160
      %p162 = scmp.ne.s32.totalorder %s151, %s154
      %p163 = scmp.eq.s32.totalorder %s31, 5
      %p164 = por %p162, %p163
      %p165 = scmp.ne.s32.totalorder %s154, %s155
      %p166 = scmp.eq.s32.totalorder %s31, 0
      %p167 = por %p165, %p166
      %p168 = scmp.ne.s32.totalorder %s154, %s155
      %p169 = scmp.eq.s32.totalorder %s32, 5
      %p170 = por %p168, %p169
      %p172 = scmp.ne.s32.totalorder %s155, %s171
      %p173 = scmp.eq.s32.totalorder %s32, 0
      %p174 = por %p172, %p173
      %s175 = smul.u32 %s33, 2
      %s176 = sadd.s32 %s175, %s35
      %s177 = smul.u32 %s52, 2
      %s178 = sadd.s32 %s177, %s44
      %s179 = ssub.s32 %s34, %s48
      %s180 = ssub.s32 %s176, %s178
      %s181 = sor.u32 %s179, %s180
      %p182 = scmp.eq.s32.totalorder %s181, 0
      %s184 = sadd.s32 %s183, 1
      %s185 = scalar_select %p182, %s183, %s184
      %p188 = pneg %p182
      %p189 = scmp.eq.s32.totalorder %s26, 5
      %p190 = por %p188, %p189
      %p191 = scmp.ne.s32.totalorder %s183, %s186
      %p192 = scmp.eq.s32.totalorder %s26, 0
      %p193 = por %p191, %p192
      %p194 = scmp.ne.s32.totalorder %s183, %s186
      %p195 = scmp.eq.s32.totalorder %s31, 5
      %p196 = por %p194, %p195
      %p197 = scmp.ne.s32.totalorder %s186, %s187
      %p198 = scmp.eq.s32.totalorder %s31, 0
      %p199 = por %p197, %p198
      %p200 = scmp.ne.s32.totalorder %s186, %s187
      %p201 = scmp.eq.s32.totalorder %s32, 5
      %p202 = por %p200, %p201
      %p204 = scmp.ne.s32.totalorder %s187, %s203
      %p205 = scmp.eq.s32.totalorder %s32, 0
      %p206 = por %p204, %p205
      %s207 = smul.u32 %s33, 2
      %s208 = sadd.s32 %s207, %s35
      %s209 = smul.u32 %s52, 2
      %s210 = sadd.s32 %s209, %s44
      %s211 = ssub.s32 %s34, %s48
      %s212 = ssub.s32 %s208, %s210
      %s213 = sor.u32 %s211, %s212
      %p214 = scmp.eq.s32.totalorder %s213, 0
      %s216 = sadd.s32 %s215, 1
      %s217 = scalar_select %p214, %s215, %s216
      %p220 = pneg %p214
      %p221 = scmp.eq.s32.totalorder %s26, 5
      %p222 = por %p220, %p221
      %p223 = scmp.ne.s32.totalorder %s215, %s218
      %p224 = scmp.eq.s32.totalorder %s26, 0
      %p225 = por %p223, %p224
      %p226 = scmp.ne.s32.totalorder %s215, %s218
      %p227 = scmp.eq.s32.totalorder %s31, 5
      %p228 = por %p226, %p227
      %p229 = scmp.ne.s32.totalorder %s218, %s219
      %p230 = scmp.eq.s32.totalorder %s31, 0
      %p231 = por %p229, %p230
      %p232 = scmp.ne.s32.totalorder %s218, %s219
      %p233 = scmp.eq.s32.totalorder %s32, 5
      %p234 = por %p232, %p233
      %p236 = scmp.ne.s32.totalorder %s219, %s235
      %p237 = scmp.eq.s32.totalorder %s32, 0
      %p238 = por %p236, %p237
      %s239 = ssub.s32 %s34, %s48
      %p240 = scmp.eq.s32.totalorder %s239, 0
      %s242 = sadd.s32 %s241, 1
      %s243 = scalar_select %p240, %s241, %s242
      %p246 = pneg %p240
      %p247 = scmp.eq.s32.totalorder %s26, 5
      %p248 = por %p246, %p247
      %p249 = scmp.ne.s32.totalorder %s241, %s244
      %p250 = scmp.eq.s32.totalorder %s26, 0
      %p251 = por %p249, %p250
      %p252 = scmp.ne.s32.totalorder %s241, %s244
      %p253 = scmp.eq.s32.totalorder %s31, 5
      %p254 = por %p252, %p253
      %p255 = scmp.ne.s32.totalorder %s244, %s245
      %p256 = scmp.eq.s32.totalorder %s31, 0
      %p257 = por %p255, %p256
      %p258 = scmp.ne.s32.totalorder %s244, %s245
      %p259 = scmp.eq.s32.totalorder %s32, 5
      %p260 = por %p258, %p259
      %p262 = scmp.ne.s32.totalorder %s245, %s261
      %p263 = scmp.eq.s32.totalorder %s32, 0
      %p264 = por %p262, %p263
      %s265 = ssub.s32 %s33, %s52
      %p266 = scmp.eq.s32.totalorder %s265, 0
      %s268 = sadd.s32 %s267, 1
      %s269 = scalar_select %p266, %s267, %s268
      %p272 = pneg %p266
      %p273 = scmp.eq.s32.totalorder %s26, 5
      %p274 = por %p272, %p273
      %p275 = scmp.ne.s32.totalorder %s267, %s270
      %p276 = scmp.eq.s32.totalorder %s26, 0
      %p277 = por %p275, %p276
      %p278 = scmp.ne.s32.totalorder %s267, %s270
      %p279 = scmp.eq.s32.totalorder %s31, 5
      %p280 = por %p278, %p279
      %p281 = scmp.ne.s32.totalorder %s270, %s271
      %p282 = scmp.eq.s32.totalorder %s31, 0
      %p283 = por %p281, %p282
      %p284 = scmp.ne.s32.totalorder %s270, %s271
      %p285 = scmp.eq.s32.totalorder %s32, 5
      %p286 = por %p284, %p285
      %p288 = scmp.ne.s32.totalorder %s271, %s287
      %p289 = scmp.eq.s32.totalorder %s32, 0
      %p290 = por %p288, %p289
      %p291 = scmp.le.s32.totalorder 1, %s26
      %p292 = scmp.lt.s32.totalorder %s26, 7
      %p293 = pnand %p291, %p292
      %p294 = pneg %p293
      // Predicated region
      $region9: #{simple_mlp_forward.1} parent=5 // pred_check
        _
      $region10: #{simple_mlp_forward.1} parent=5 // pred_check_branch
        %296 = sbr.rel (%p293) target = $region12
      $region11: #{simple_mlp_forward.1} parent=5 // pred_region
        %s297 = ssub.s32 %s26, 1
      $region12: #{simple_mlp_forward.1} parent=5 // pred_fallthru
        _
      %p298 = scmp.lt.s32.totalorder %s26, 6
      // Predicated region
      $region13: #{simple_mlp_forward.1} parent=5 // pred_check
        %p299 = pneg %p298
      $region14: #{simple_mlp_forward.1} parent=5 // pred_check_branch
        %301 = sbr.rel (%p299) target = $region16
      $region15: #{simple_mlp_forward.1} parent=5 // pred_region
        // Predicated region
        $region17: #{simple_mlp_forward.1} parent=15 // pred_check
          %p302 = pneg %p65
        $region18: #{simple_mlp_forward.1} parent=15 // pred_check_branch
          %304 = sbr.rel (%p302) target = $region20
        $region19: #{simple_mlp_forward.1} parent=15 // pred_region
          %s305 = sand.u32 %s55, 1
          %s306 = scalar_lea.sflag [#allocation3], %s305
          %s307 = sand.u32 %s55, 1
          %s308 = smul.addr %s307, 16
          %s309 = scalar_lea.vmem [#allocation2], %s308
          %s311 = ssub.s32 256, 256
          %312 = vsyncadd %s306, %s311
          %s313 = smul.addr %s34, 2
          %s314 = smul.addr %s313, 128
          %s315 = scalar_lea.hbm %s0, %s314
          %s317 = sshll.u32 %s309, 4
          %s318 = int_to_ptr.vmem [resolvable:$true] %s317
          %320 = dma.hbm_to_vmem [thread:$0]  %s315, 256, %s318, %s306
        $region20: #{simple_mlp_forward.1} parent=15 // pred_fallthru
          _
        // Predicated region
        $region21: #{simple_mlp_forward.1} parent=15 // pred_check
          %p321 = pneg %p97
        $region22: #{simple_mlp_forward.1} parent=15 // pred_check_branch
          %323 = sbr.rel (%p321) target = $region24
        $region23: #{simple_mlp_forward.1} parent=15 // pred_region
          %s324 = sand.u32 %s26, 1
          %s325 = scalar_lea.sflag [#allocation6], %s324
          %s326 = sand.u32 %s87, 1
          %s327 = smul.addr %s326, 512
          %s328 = scalar_lea.vmem [#allocation5], %s327
          %s329 = smul.u32 %s33, 2
          %s330 = sadd.s32 %s329, %s35
          %s331 = smul.u32 2, %s330
          %s333 = ssub.s32 8192, 8192
          %334 = vsyncadd %s325, %s333
          %s335 = smul.addr %s34, 128
          %s336 = sadd.s32 %s331, %s335
          %s337 = smul.addr %s336, 128
          %s338 = scalar_lea.hbm %s1, %s337
          %s339 = sshll.u32 %s328, 4
          %s340 = int_to_ptr.vmem [resolvable:$true] %s339
          %345 = dma.hbm_to_vmem [thread:$0]  %s338, 8192, %s340, %s325, 512, 256, 16
        $region24: #{simple_mlp_forward.1} parent=15 // pred_fallthru
          _
        // Predicated region
        $region25: #{simple_mlp_forward.1} parent=15 // pred_check
          %p346 = pneg %p129
        $region26: #{simple_mlp_forward.1} parent=15 // pred_check_branch
          %348 = sbr.rel (%p346) target = $region28
        $region27: #{simple_mlp_forward.1} parent=15 // pred_region
          %s349 = sand.u32 %s26, 1
          %s350 = scalar_lea.sflag [#allocation6], %s349
          %s351 = sand.u32 %s119, 1
          %s352 = smul.addr %s351, 2
          %s353 = scalar_lea.vmem [#allocation7], %s352
          %s354 = smul.u32 %s33, 2
          %s355 = sadd.s32 %s354, %s35
          %s356 = smul.u32 2, %s355
          %s358 = ssub.s32 32, 32
          %359 = vsyncadd %s350, %s358
          %s360 = smul.addr %s34, 4
          %s361 = sadd.s32 %s356, %s360
          %s362 = smul.addr %s361, 16
          %s363 = scalar_lea.hbm %s2, %s362
          %s365 = sshll.u32 %s353, 4
          %s366 = int_to_ptr.vmem [resolvable:$true] %s365
          %368 = dma.hbm_to_vmem [thread:$0]  %s363, 32, %s366, %s350
        $region28: #{simple_mlp_forward.1} parent=15 // pred_fallthru
          _
        // Predicated region
        $region29: #{simple_mlp_forward.1} parent=15 // pred_check
          %p369 = pneg %p161
        $region30: #{simple_mlp_forward.1} parent=15 // pred_check_branch
          %371 = sbr.rel (%p369) target = $region32
        $region31: #{simple_mlp_forward.1} parent=15 // pred_region
          %s372 = sand.u32 %s26, 1
          %s373 = scalar_lea.sflag [#allocation9], %s372
          %s374 = sand.u32 %s151, 1
          %s375 = smul.addr %s374, 512
          %s376 = scalar_lea.vmem [#allocation8], %s375
          %s377 = smul.u32 %s33, 2
          %s378 = sadd.s32 %s377, %s35
          %s379 = smul.u32 2, %s378
          %s381 = ssub.s32 8192, 8192
          %382 = vsyncadd %s373, %s381
          %s383 = smul.addr %s34, 128
          %s384 = sadd.s32 %s379, %s383
          %s385 = smul.addr %s384, 128
          %s386 = scalar_lea.hbm %s3, %s385
          %s387 = sshll.u32 %s376, 4
          %s388 = int_to_ptr.vmem [resolvable:$true] %s387
          %393 = dma.hbm_to_vmem [thread:$0]  %s386, 8192, %s388, %s373, 512, 256, 16
        $region32: #{simple_mlp_forward.1} parent=15 // pred_fallthru
          _
        // Predicated region
        $region33: #{simple_mlp_forward.1} parent=15 // pred_check
          %p394 = pneg %p193
        $region34: #{simple_mlp_forward.1} parent=15 // pred_check_branch
          %396 = sbr.rel (%p394) target = $region36
        $region35: #{simple_mlp_forward.1} parent=15 // pred_region
          %s397 = sand.u32 %s26, 1
          %s398 = scalar_lea.sflag [#allocation9], %s397
          %s399 = sand.u32 %s183, 1
          %s400 = smul.addr %s399, 2
          %s401 = scalar_lea.vmem [#allocation10], %s400
          %s402 = smul.u32 %s33, 2
          %s403 = sadd.s32 %s402, %s35
          %s404 = smul.u32 2, %s403
          %s406 = ssub.s32 32, 32
          %407 = vsyncadd %s398, %s406
          %s408 = smul.addr %s34, 4
          %s409 = sadd.s32 %s404, %s408
          %s410 = smul.addr %s409, 16
          %s411 = scalar_lea.hbm %s4, %s410
          %s413 = sshll.u32 %s401, 4
          %s414 = int_to_ptr.vmem [resolvable:$true] %s413
          %416 = dma.hbm_to_vmem [thread:$0]  %s411, 32, %s414, %s398
        $region36: #{simple_mlp_forward.1} parent=15 // pred_fallthru
          _
        // Predicated region
        $region37: #{simple_mlp_forward.1} parent=15 // pred_check
          %p417 = pneg %p225
        $region38: #{simple_mlp_forward.1} parent=15 // pred_check_branch
          %419 = sbr.rel (%p417) target = $region40
        $region39: #{simple_mlp_forward.1} parent=15 // pred_region
          %s420 = sand.u32 %s26, 1
          %s421 = scalar_lea.sflag [#allocation12], %s420
          %s422 = sand.u32 %s215, 1
          %s423 = smul.addr %s422, 512
          %s424 = scalar_lea.vmem [#allocation11], %s423
          %s425 = smul.u32 %s33, 2
          %s426 = sadd.s32 %s425, %s35
          %s427 = smul.u32 32, %s426
          %s429 = ssub.s32 8192, 8192
          %430 = vsyncadd %s421, %s429
          %s431 = smul.addr %s427, 2
          %s432 = smul.addr %s34, 128
          %s433 = sadd.s32 %s431, %s432
          %s434 = smul.addr %s433, 128
          %s435 = scalar_lea.hbm %s5, %s434
          %s436 = sshll.u32 %s424, 4
          %s437 = int_to_ptr.vmem [resolvable:$true] %s436
          %442 = dma.hbm_to_vmem [thread:$0]  %s435, 8192, %s437, %s421, 256, 256, 16
        $region40: #{simple_mlp_forward.1} parent=15 // pred_fallthru
          _
        // Predicated region
        $region41: #{simple_mlp_forward.1} parent=15 // pred_check
          %p443 = pneg %p251
        $region42: #{simple_mlp_forward.1} parent=15 // pred_check_branch
          %445 = sbr.rel (%p443) target = $region44
        $region43: #{simple_mlp_forward.1} parent=15 // pred_region
          %s446 = sand.u32 %s26, 1
          %s447 = scalar_lea.sflag [#allocation12], %s446
          %s448 = sand.u32 %s241, 1
          %s449 = smul.addr %s448, 2
          %s450 = scalar_lea.vmem [#allocation13], %s449
          %s452 = ssub.s32 32, 32
          %453 = vsyncadd %s447, %s452
          %s454 = smul.addr %s34, 2
          %s455 = smul.addr %s454, 16
          %s456 = scalar_lea.hbm %s6, %s455
          %s458 = sshll.u32 %s450, 4
          %s459 = int_to_ptr.vmem [resolvable:$true] %s458
          %461 = dma.hbm_to_vmem [thread:$0]  %s456, 32, %s459, %s447
        $region44: #{simple_mlp_forward.1} parent=15 // pred_fallthru
          _
      $region16: #{simple_mlp_forward.1} parent=5 // pred_fallthru
        _
      %p462 = scmp.le.s32.totalorder 1, %s26
      %p463 = scmp.lt.s32.totalorder %s26, 7
      %p464 = pnand %p462, %p463
      %p465 = pneg %p464
      // Predicated region
      $region45: #{simple_mlp_forward.1} parent=5 // pred_check
        _
      $region46: #{simple_mlp_forward.1} parent=5 // pred_check_branch
        %467 = sbr.rel (%p464) target = $region48
      $region47: #{simple_mlp_forward.1} parent=5 // pred_region
        %s468 = ssub.s32 %s26, 1
        %s469 = sand.u32 %s58, 1
        %s470 = scalar_lea.sflag [#allocation3], %s469
        %s471 = sand.u32 %s58, 1
        %s472 = smul.addr %s471, 16
        %s473 = scalar_lea.vmem [#allocation2], %s472
        // Predicated region
        $region49: #{simple_mlp_forward.1} parent=47 // pred_check
          %p474 = pneg %p71
        $region50: #{simple_mlp_forward.1} parent=47 // pred_check_branch
          %476 = sbr.rel (%p474) target = $region52
        $region51: #{simple_mlp_forward.1} parent=47 // pred_region
          %477 = dma.done %s470, 256
        $region52: #{simple_mlp_forward.1} parent=47 // pred_fallthru
          _
        %s478 = sand.u32 %s31, 1
        %s479 = scalar_lea.sflag [#allocation6], %s478
        %s480 = sand.u32 %s90, 1
        %s481 = smul.addr %s480, 512
        %s482 = scalar_lea.vmem [#allocation5], %s481
        // Predicated region
        $region53: #{simple_mlp_forward.1} parent=47 // pred_check
          %p483 = pneg %p103
        $region54: #{simple_mlp_forward.1} parent=47 // pred_check_branch
          %485 = sbr.rel (%p483) target = $region56
        $region55: #{simple_mlp_forward.1} parent=47 // pred_region
          %486 = dma.done %s479, 8192
        $region56: #{simple_mlp_forward.1} parent=47 // pred_fallthru
          _
        %s487 = sand.u32 %s31, 1
        %s488 = scalar_lea.sflag [#allocation6], %s487
        %s489 = sand.u32 %s122, 1
        %s490 = smul.addr %s489, 2
        %s491 = scalar_lea.vmem [#allocation7], %s490
        // Predicated region
        $region57: #{simple_mlp_forward.1} parent=47 // pred_check
          %p492 = pneg %p135
        $region58: #{simple_mlp_forward.1} parent=47 // pred_check_branch
          %494 = sbr.rel (%p492) target = $region60
        $region59: #{simple_mlp_forward.1} parent=47 // pred_region
          %495 = dma.done %s488, 32
        $region60: #{simple_mlp_forward.1} parent=47 // pred_fallthru
          _
        %s496 = sand.u32 %s31, 1
        %s497 = scalar_lea.sflag [#allocation9], %s496
        %s498 = sand.u32 %s154, 1
        %s499 = smul.addr %s498, 512
        %s500 = scalar_lea.vmem [#allocation8], %s499
        // Predicated region
        $region61: #{simple_mlp_forward.1} parent=47 // pred_check
          %p501 = pneg %p167
        $region62: #{simple_mlp_forward.1} parent=47 // pred_check_branch
          %503 = sbr.rel (%p501) target = $region64
        $region63: #{simple_mlp_forward.1} parent=47 // pred_region
          %504 = dma.done %s497, 8192
        $region64: #{simple_mlp_forward.1} parent=47 // pred_fallthru
          _
        %s505 = sand.u32 %s31, 1
        %s506 = scalar_lea.sflag [#allocation9], %s505
        %s507 = sand.u32 %s186, 1
        %s508 = smul.addr %s507, 2
        %s509 = scalar_lea.vmem [#allocation10], %s508
        // Predicated region
        $region65: #{simple_mlp_forward.1} parent=47 // pred_check
          %p510 = pneg %p199
        $region66: #{simple_mlp_forward.1} parent=47 // pred_check_branch
          %512 = sbr.rel (%p510) target = $region68
        $region67: #{simple_mlp_forward.1} parent=47 // pred_region
          %513 = dma.done %s506, 32
        $region68: #{simple_mlp_forward.1} parent=47 // pred_fallthru
          _
        %s514 = sand.u32 %s31, 1
        %s515 = scalar_lea.sflag [#allocation12], %s514
        %s516 = sand.u32 %s218, 1
        %s517 = smul.addr %s516, 512
        %s518 = scalar_lea.vmem [#allocation11], %s517
        // Predicated region
        $region69: #{simple_mlp_forward.1} parent=47 // pred_check
          %p519 = pneg %p231
        $region70: #{simple_mlp_forward.1} parent=47 // pred_check_branch
          %521 = sbr.rel (%p519) target = $region72
        $region71: #{simple_mlp_forward.1} parent=47 // pred_region
          %522 = dma.done %s515, 8192
        $region72: #{simple_mlp_forward.1} parent=47 // pred_fallthru
          _
        %s523 = sand.u32 %s31, 1
        %s524 = scalar_lea.sflag [#allocation12], %s523
        %s525 = sand.u32 %s244, 1
        %s526 = smul.addr %s525, 2
        %s527 = scalar_lea.vmem [#allocation13], %s526
        // Predicated region
        $region73: #{simple_mlp_forward.1} parent=47 // pred_check
          %p528 = pneg %p257
        $region74: #{simple_mlp_forward.1} parent=47 // pred_check_branch
          %530 = sbr.rel (%p528) target = $region76
        $region75: #{simple_mlp_forward.1} parent=47 // pred_region
          %531 = dma.done %s524, 32
        $region76: #{simple_mlp_forward.1} parent=47 // pred_fallthru
          _
        %s532 = sand.u32 %s58, 1
        %s533 = scalar_lea.sflag [#allocation3], %s532
        %s534 = sand.u32 %s58, 1
        %s535 = smul.addr %s534, 16
        %s536 = scalar_lea.vmem [#allocation2], %s535
        %p537 = pneg %p71
        %p538 = pneg %p68
        %s539 = sand.u32 %s31, 1
        %s540 = scalar_lea.sflag [#allocation6], %s539
        %s541 = sand.u32 %s90, 1
        %s542 = smul.addr %s541, 512
        %s543 = scalar_lea.vmem [#allocation5], %s542
        %p544 = pneg %p103
        %p545 = pneg %p100
        %s546 = sand.u32 %s31, 1
        %s547 = scalar_lea.sflag [#allocation6], %s546
        %s548 = sand.u32 %s122, 1
        %s549 = smul.addr %s548, 2
        %s550 = scalar_lea.vmem [#allocation7], %s549
        %p551 = pneg %p135
        %p552 = pneg %p132
        %s553 = sand.u32 %s31, 1
        %s554 = scalar_lea.sflag [#allocation9], %s553
        %s555 = sand.u32 %s154, 1
        %s556 = smul.addr %s555, 512
        %s557 = scalar_lea.vmem [#allocation8], %s556
        %p558 = pneg %p167
        %p559 = pneg %p164
        %s560 = sand.u32 %s31, 1
        %s561 = scalar_lea.sflag [#allocation9], %s560
        %s562 = sand.u32 %s186, 1
        %s563 = smul.addr %s562, 2
        %s564 = scalar_lea.vmem [#allocation10], %s563
        %p565 = pneg %p199
        %p566 = pneg %p196
        %s567 = sand.u32 %s31, 1
        %s568 = scalar_lea.sflag [#allocation12], %s567
        %s569 = sand.u32 %s218, 1
        %s570 = smul.addr %s569, 512
        %s571 = scalar_lea.vmem [#allocation11], %s570
        %p572 = pneg %p231
        %p573 = pneg %p228
        %s574 = sand.u32 %s31, 1
        %s575 = scalar_lea.sflag [#allocation12], %s574
        %s576 = sand.u32 %s244, 1
        %s577 = smul.addr %s576, 2
        %s578 = scalar_lea.vmem [#allocation13], %s577
        %p579 = pneg %p257
        %p580 = pneg %p254
        %p581 = pneg %p283
        %p582 = pneg %p280
        %s583 = smul.u32 %s36, 2
        %s584 = sadd.s32 %s583, %s38
        %s585 = smul.u32 2, %s584
        %s586 = smul.u32 %s36, 2
        %s587 = sadd.s32 %s586, %s38
        %s588 = smul.u32 2, %s587
        %s589 = smul.u32 %s36, 2
        %s590 = sadd.s32 %s589, %s38
        %s591 = smul.u32 2, %s590
        %s592 = smul.u32 %s36, 2
        %s593 = sadd.s32 %s592, %s38
        %s594 = smul.u32 2, %s593
        %s595 = smul.u32 %s36, 2
        %s596 = sadd.s32 %s595, %s38
        %s597 = smul.u32 32, %s596
        %p598 = scmp.eq.s32.totalorder %s37, 0
        %p599 = scmp.eq.s32.totalorder %s38, 0
        %p600 = pnand %p598, %p599
        %p601 = pneg %p600
        // Predicated region
        $region77: #{simple_mlp_forward.1} parent=47 // pred_check
          _
        $region78: #{simple_mlp_forward.1} parent=47 // pred_check_branch
          %603 = sbr.rel (%p600) target = $region80
        $region79: #{simple_mlp_forward.1} parent=47 // pred_region
          %604 = vst [vmem:[#allocation14] sm:$0xff] 0.0
          %605 = vst [vmem:[#allocation14 + $0x8] sm:$0xff] 0.0
        $region80: #{simple_mlp_forward.1} parent=47 // pred_fallthru
          _
        %v606 = vld [vmem:[%s473] sm:$0xff]
        %v607 = vld [vmem:[%s473 + $0x8] sm:$0xff]
        %v608 = vld [vmem:[%s482] sm:$0xff]
        %v609 = vld [vmem:[%s482 + $0x8] sm:$0xff]
        %v610 = vld [vmem:[%s482 + $0x10] sm:$0xff]
        %v611 = vld [vmem:[%s482 + $0x18] sm:$0xff]
        %v612 = vld [vmem:[%s482 + $0x20] sm:$0xff]
        %v613 = vld [vmem:[%s482 + $0x28] sm:$0xff]
        %v614 = vld [vmem:[%s482 + $0x30] sm:$0xff]
        %v615 = vld [vmem:[%s482 + $0x38] sm:$0xff]
        %v616 = vld [vmem:[%s482 + $0x40] sm:$0xff]
        %v617 = vld [vmem:[%s482 + $0x48] sm:$0xff]
        %v618 = vld [vmem:[%s482 + $0x50] sm:$0xff]
        %v619 = vld [vmem:[%s482 + $0x58] sm:$0xff]
        %v620 = vld [vmem:[%s482 + $0x60] sm:$0xff]
        %v621 = vld [vmem:[%s482 + $0x68] sm:$0xff]
        %v622 = vld [vmem:[%s482 + $0x70] sm:$0xff]
        %v623 = vld [vmem:[%s482 + $0x78] sm:$0xff]
        %v624 = vld [vmem:[%s482 + $0x80] sm:$0xff]
        %v625 = vld [vmem:[%s482 + $0x88] sm:$0xff]
        %v626 = vld [vmem:[%s482 + $0x90] sm:$0xff]
        %v627 = vld [vmem:[%s482 + $0x98] sm:$0xff]
        %v628 = vld [vmem:[%s482 + $0xa0] sm:$0xff]
        %v629 = vld [vmem:[%s482 + $0xa8] sm:$0xff]
        %v630 = vld [vmem:[%s482 + $0xb0] sm:$0xff]
        %v631 = vld [vmem:[%s482 + $0xb8] sm:$0xff]
        %v632 = vld [vmem:[%s482 + $0xc0] sm:$0xff]
        %v633 = vld [vmem:[%s482 + $0xc8] sm:$0xff]
        %v634 = vld [vmem:[%s482 + $0xd0] sm:$0xff]
        %v635 = vld [vmem:[%s482 + $0xd8] sm:$0xff]
        %v636 = vld [vmem:[%s482 + $0xe0] sm:$0xff]
        %v637 = vld [vmem:[%s482 + $0xe8] sm:$0xff]
        %v638 = vld [vmem:[%s482 + $0xf0] sm:$0xff]
        %v639 = vld [vmem:[%s482 + $0xf8] sm:$0xff]
        %v640 = vld [vmem:[%s482 + $0x100] sm:$0xff]
        %v641 = vld [vmem:[%s482 + $0x108] sm:$0xff]
        %v642 = vld [vmem:[%s482 + $0x110] sm:$0xff]
        %v643 = vld [vmem:[%s482 + $0x118] sm:$0xff]
        %v644 = vld [vmem:[%s482 + $0x120] sm:$0xff]
        %v645 = vld [vmem:[%s482 + $0x128] sm:$0xff]
        %v646 = vld [vmem:[%s482 + $0x130] sm:$0xff]
        %v647 = vld [vmem:[%s482 + $0x138] sm:$0xff]
        %v648 = vld [vmem:[%s482 + $0x140] sm:$0xff]
        %v649 = vld [vmem:[%s482 + $0x148] sm:$0xff]
        %v650 = vld [vmem:[%s482 + $0x150] sm:$0xff]
        %v651 = vld [vmem:[%s482 + $0x158] sm:$0xff]
        %v652 = vld [vmem:[%s482 + $0x160] sm:$0xff]
        %v653 = vld [vmem:[%s482 + $0x168] sm:$0xff]
        %v654 = vld [vmem:[%s482 + $0x170] sm:$0xff]
        %v655 = vld [vmem:[%s482 + $0x178] sm:$0xff]
        %v656 = vld [vmem:[%s482 + $0x180] sm:$0xff]
        %v657 = vld [vmem:[%s482 + $0x188] sm:$0xff]
        %v658 = vld [vmem:[%s482 + $0x190] sm:$0xff]
        %v659 = vld [vmem:[%s482 + $0x198] sm:$0xff]
        %v660 = vld [vmem:[%s482 + $0x1a0] sm:$0xff]
        %v661 = vld [vmem:[%s482 + $0x1a8] sm:$0xff]
        %v662 = vld [vmem:[%s482 + $0x1b0] sm:$0xff]
        %v663 = vld [vmem:[%s482 + $0x1b8] sm:$0xff]
        %v664 = vld [vmem:[%s482 + $0x1c0] sm:$0xff]
        %v665 = vld [vmem:[%s482 + $0x1c8] sm:$0xff]
        %v666 = vld [vmem:[%s482 + $0x1d0] sm:$0xff]
        %v667 = vld [vmem:[%s482 + $0x1d8] sm:$0xff]
        %v668 = vld [vmem:[%s482 + $0x1e0] sm:$0xff]
        %v669 = vld [vmem:[%s482 + $0x1e8] sm:$0xff]
        %v670 = vld [vmem:[%s482 + $0x1f0] sm:$0xff]
        %v671 = vld [vmem:[%s482 + $0x1f8] sm:$0xff]
        %v672 = vld [vmem:[%s500] sm:$0xff]
        %v673 = vld [vmem:[%s500 + $0x8] sm:$0xff]
        %v674 = vld [vmem:[%s500 + $0x10] sm:$0xff]
        %v675 = vld [vmem:[%s500 + $0x18] sm:$0xff]
        %v676 = vld [vmem:[%s500 + $0x20] sm:$0xff]
        %v677 = vld [vmem:[%s500 + $0x28] sm:$0xff]
        %v678 = vld [vmem:[%s500 + $0x30] sm:$0xff]
        %v679 = vld [vmem:[%s500 + $0x38] sm:$0xff]
        %v680 = vld [vmem:[%s500 + $0x40] sm:$0xff]
        %v681 = vld [vmem:[%s500 + $0x48] sm:$0xff]
        %v682 = vld [vmem:[%s500 + $0x50] sm:$0xff]
        %v683 = vld [vmem:[%s500 + $0x58] sm:$0xff]
        %v684 = vld [vmem:[%s500 + $0x60] sm:$0xff]
        %v685 = vld [vmem:[%s500 + $0x68] sm:$0xff]
        %v686 = vld [vmem:[%s500 + $0x70] sm:$0xff]
        %v687 = vld [vmem:[%s500 + $0x78] sm:$0xff]
        %v688 = vld [vmem:[%s500 + $0x80] sm:$0xff]
        %v689 = vld [vmem:[%s500 + $0x88] sm:$0xff]
        %v690 = vld [vmem:[%s500 + $0x90] sm:$0xff]
        %v691 = vld [vmem:[%s500 + $0x98] sm:$0xff]
        %v692 = vld [vmem:[%s500 + $0xa0] sm:$0xff]
        %v693 = vld [vmem:[%s500 + $0xa8] sm:$0xff]
        %v694 = vld [vmem:[%s500 + $0xb0] sm:$0xff]
        %v695 = vld [vmem:[%s500 + $0xb8] sm:$0xff]
        %v696 = vld [vmem:[%s500 + $0xc0] sm:$0xff]
        %v697 = vld [vmem:[%s500 + $0xc8] sm:$0xff]
        %v698 = vld [vmem:[%s500 + $0xd0] sm:$0xff]
        %v699 = vld [vmem:[%s500 + $0xd8] sm:$0xff]
        %v700 = vld [vmem:[%s500 + $0xe0] sm:$0xff]
        %v701 = vld [vmem:[%s500 + $0xe8] sm:$0xff]
        %v702 = vld [vmem:[%s500 + $0xf0] sm:$0xff]
        %v703 = vld [vmem:[%s500 + $0xf8] sm:$0xff]
        %v704 = vld [vmem:[%s500 + $0x100] sm:$0xff]
        %v705 = vld [vmem:[%s500 + $0x108] sm:$0xff]
        %v706 = vld [vmem:[%s500 + $0x110] sm:$0xff]
        %v707 = vld [vmem:[%s500 + $0x118] sm:$0xff]
        %v708 = vld [vmem:[%s500 + $0x120] sm:$0xff]
        %v709 = vld [vmem:[%s500 + $0x128] sm:$0xff]
        %v710 = vld [vmem:[%s500 + $0x130] sm:$0xff]
        %v711 = vld [vmem:[%s500 + $0x138] sm:$0xff]
        %v712 = vld [vmem:[%s500 + $0x140] sm:$0xff]
        %v713 = vld [vmem:[%s500 + $0x148] sm:$0xff]
        %v714 = vld [vmem:[%s500 + $0x150] sm:$0xff]
        %v715 = vld [vmem:[%s500 + $0x158] sm:$0xff]
        %v716 = vld [vmem:[%s500 + $0x160] sm:$0xff]
        %v717 = vld [vmem:[%s500 + $0x168] sm:$0xff]
        %v718 = vld [vmem:[%s500 + $0x170] sm:$0xff]
        %v719 = vld [vmem:[%s500 + $0x178] sm:$0xff]
        %v720 = vld [vmem:[%s500 + $0x180] sm:$0xff]
        %v721 = vld [vmem:[%s500 + $0x188] sm:$0xff]
        %v722 = vld [vmem:[%s500 + $0x190] sm:$0xff]
        %v723 = vld [vmem:[%s500 + $0x198] sm:$0xff]
        %v724 = vld [vmem:[%s500 + $0x1a0] sm:$0xff]
        %v725 = vld [vmem:[%s500 + $0x1a8] sm:$0xff]
        %v726 = vld [vmem:[%s500 + $0x1b0] sm:$0xff]
        %v727 = vld [vmem:[%s500 + $0x1b8] sm:$0xff]
        %v728 = vld [vmem:[%s500 + $0x1c0] sm:$0xff]
        %v729 = vld [vmem:[%s500 + $0x1c8] sm:$0xff]
        %v730 = vld [vmem:[%s500 + $0x1d0] sm:$0xff]
        %v731 = vld [vmem:[%s500 + $0x1d8] sm:$0xff]
        %v732 = vld [vmem:[%s500 + $0x1e0] sm:$0xff]
        %v733 = vld [vmem:[%s500 + $0x1e8] sm:$0xff]
        %v734 = vld [vmem:[%s500 + $0x1f0] sm:$0xff]
        %v735 = vld [vmem:[%s500 + $0x1f8] sm:$0xff]
        %v736 = vld [vmem:[%s518] sm:$0xff]
        %v737 = vld [vmem:[%s518 + $0x8] sm:$0xff]
        %v738 = vld [vmem:[%s518 + $0x10] sm:$0xff]
        %v739 = vld [vmem:[%s518 + $0x18] sm:$0xff]
        %v740 = vld [vmem:[%s518 + $0x20] sm:$0xff]
        %v741 = vld [vmem:[%s518 + $0x28] sm:$0xff]
        %v742 = vld [vmem:[%s518 + $0x30] sm:$0xff]
        %v743 = vld [vmem:[%s518 + $0x38] sm:$0xff]
        %v744 = vld [vmem:[%s518 + $0x40] sm:$0xff]
        %v745 = vld [vmem:[%s518 + $0x48] sm:$0xff]
        %v746 = vld [vmem:[%s518 + $0x50] sm:$0xff]
        %v747 = vld [vmem:[%s518 + $0x58] sm:$0xff]
        %v748 = vld [vmem:[%s518 + $0x60] sm:$0xff]
        %v749 = vld [vmem:[%s518 + $0x68] sm:$0xff]
        %v750 = vld [vmem:[%s518 + $0x70] sm:$0xff]
        %v751 = vld [vmem:[%s518 + $0x78] sm:$0xff]
        %v752 = vld [vmem:[%s518 + $0x80] sm:$0xff]
        %v753 = vld [vmem:[%s518 + $0x88] sm:$0xff]
        %v754 = vld [vmem:[%s518 + $0x90] sm:$0xff]
        %v755 = vld [vmem:[%s518 + $0x98] sm:$0xff]
        %v756 = vld [vmem:[%s518 + $0xa0] sm:$0xff]
        %v757 = vld [vmem:[%s518 + $0xa8] sm:$0xff]
        %v758 = vld [vmem:[%s518 + $0xb0] sm:$0xff]
        %v759 = vld [vmem:[%s518 + $0xb8] sm:$0xff]
        %v760 = vld [vmem:[%s518 + $0xc0] sm:$0xff]
        %v761 = vld [vmem:[%s518 + $0xc8] sm:$0xff]
        %v762 = vld [vmem:[%s518 + $0xd0] sm:$0xff]
        %v763 = vld [vmem:[%s518 + $0xd8] sm:$0xff]
        %v764 = vld [vmem:[%s518 + $0xe0] sm:$0xff]
        %v765 = vld [vmem:[%s518 + $0xe8] sm:$0xff]
        %v766 = vld [vmem:[%s518 + $0xf0] sm:$0xff]
        %v767 = vld [vmem:[%s518 + $0xf8] sm:$0xff]
        %v768 = vld [vmem:[%s518 + $0x100] sm:$0xff]
        %v769 = vld [vmem:[%s518 + $0x108] sm:$0xff]
        %v770 = vld [vmem:[%s518 + $0x110] sm:$0xff]
        %v771 = vld [vmem:[%s518 + $0x118] sm:$0xff]
        %v772 = vld [vmem:[%s518 + $0x120] sm:$0xff]
        %v773 = vld [vmem:[%s518 + $0x128] sm:$0xff]
        %v774 = vld [vmem:[%s518 + $0x130] sm:$0xff]
        %v775 = vld [vmem:[%s518 + $0x138] sm:$0xff]
        %v776 = vld [vmem:[%s518 + $0x140] sm:$0xff]
        %v777 = vld [vmem:[%s518 + $0x148] sm:$0xff]
        %v778 = vld [vmem:[%s518 + $0x150] sm:$0xff]
        %v779 = vld [vmem:[%s518 + $0x158] sm:$0xff]
        %v780 = vld [vmem:[%s518 + $0x160] sm:$0xff]
        %v781 = vld [vmem:[%s518 + $0x168] sm:$0xff]
        %v782 = vld [vmem:[%s518 + $0x170] sm:$0xff]
        %v783 = vld [vmem:[%s518 + $0x178] sm:$0xff]
        %v784 = vld [vmem:[%s518 + $0x180] sm:$0xff]
        %v785 = vld [vmem:[%s518 + $0x188] sm:$0xff]
        %v786 = vld [vmem:[%s518 + $0x190] sm:$0xff]
        %v787 = vld [vmem:[%s518 + $0x198] sm:$0xff]
        %v788 = vld [vmem:[%s518 + $0x1a0] sm:$0xff]
        %v789 = vld [vmem:[%s518 + $0x1a8] sm:$0xff]
        %v790 = vld [vmem:[%s518 + $0x1b0] sm:$0xff]
        %v791 = vld [vmem:[%s518 + $0x1b8] sm:$0xff]
        %v792 = vld [vmem:[%s518 + $0x1c0] sm:$0xff]
        %v793 = vld [vmem:[%s518 + $0x1c8] sm:$0xff]
        %v794 = vld [vmem:[%s518 + $0x1d0] sm:$0xff]
        %v795 = vld [vmem:[%s518 + $0x1d8] sm:$0xff]
        %v796 = vld [vmem:[%s518 + $0x1e0] sm:$0xff]
        %v797 = vld [vmem:[%s518 + $0x1e8] sm:$0xff]
        %v798 = vld [vmem:[%s518 + $0x1f0] sm:$0xff]
        %v799 = vld [vmem:[%s518 + $0x1f8] sm:$0xff]
        %v800 = vld [vmem:[%s491] sm:$0x3]
        %v802 = vlaneseq
        %v803 = vshrl.u32 %v802, 7
        %v804 = vsub.s32 0, %v803
        %v805 = vrot.slane %v800, %v804
        %v806 = vlaneseq
        %v807 = vshrl.u32 %v806, 7
        %v808 = vsub.s32 1, %v807
        %v809 = vrot.slane %v800, %v808
        %812 = vmatprep.subr.mxu0 %v609
        %813 = vmatpush1.msra.mxu0 %v608
        %814 = vmatprep.subr.mxu0 %v611
        %815 = vmatpush1.msra.mxu0 %v610
        %816 = vmatprep.subr.mxu0 %v613
        %817 = vmatpush1.msra.mxu0 %v612
        %818 = vmatprep.subr.mxu0 %v615
        %819 = vmatpush1.msra.mxu0 %v614
        %820 = vmatprep.subr.mxu0 %v617
        %821 = vmatpush1.msra.mxu0 %v616
        %822 = vmatprep.subr.mxu0 %v619
        %823 = vmatpush1.msra.mxu0 %v618
        %824 = vmatprep.subr.mxu0 %v621
        %825 = vmatpush1.msra.mxu0 %v620
        %826 = vmatprep.subr.mxu0 %v623
        %827 = vmatpush1.msra.mxu0 %v622
        %828 = vmatprep.subr.mxu0 %v625
        %829 = vmatpush1.msra.mxu0 %v624
        %830 = vmatprep.subr.mxu0 %v627
        %831 = vmatpush1.msra.mxu0 %v626
        %832 = vmatprep.subr.mxu0 %v629
        %833 = vmatpush1.msra.mxu0 %v628
        %834 = vmatprep.subr.mxu0 %v631
        %835 = vmatpush1.msra.mxu0 %v630
        %836 = vmatprep.subr.mxu0 %v633
        %837 = vmatpush1.msra.mxu0 %v632
        %838 = vmatprep.subr.mxu0 %v635
        %839 = vmatpush1.msra.mxu0 %v634
        %840 = vmatprep.subr.mxu0 %v637
        %841 = vmatpush1.msra.mxu0 %v636
        %842 = vmatprep.subr.mxu0 %v639
        %843 = vmatpush1.msra.mxu0 %v638
        %844 = vmatprep.subr.mxu0 %v641
        %845 = vmatpush1.msra.mxu0 %v640
        %846 = vmatprep.subr.mxu0 %v643
        %847 = vmatpush1.msra.mxu0 %v642
        %848 = vmatprep.subr.mxu0 %v645
        %849 = vmatpush1.msra.mxu0 %v644
        %850 = vmatprep.subr.mxu0 %v647
        %851 = vmatpush1.msra.mxu0 %v646
        %852 = vmatprep.subr.mxu0 %v649
        %853 = vmatpush1.msra.mxu0 %v648
        %854 = vmatprep.subr.mxu0 %v651
        %855 = vmatpush1.msra.mxu0 %v650
        %856 = vmatprep.subr.mxu0 %v653
        %857 = vmatpush1.msra.mxu0 %v652
        %858 = vmatprep.subr.mxu0 %v655
        %859 = vmatpush1.msra.mxu0 %v654
        %860 = vmatprep.subr.mxu0 %v657
        %861 = vmatpush1.msra.mxu0 %v656
        %862 = vmatprep.subr.mxu0 %v659
        %863 = vmatpush1.msra.mxu0 %v658
        %864 = vmatprep.subr.mxu0 %v661
        %865 = vmatpush1.msra.mxu0 %v660
        %866 = vmatprep.subr.mxu0 %v663
        %867 = vmatpush1.msra.mxu0 %v662
        %868 = vmatprep.subr.mxu0 %v665
        %869 = vmatpush1.msra.mxu0 %v664
        %870 = vmatprep.subr.mxu0 %v667
        %871 = vmatpush1.msra.mxu0 %v666
        %872 = vmatprep.subr.mxu0 %v669
        %873 = vmatpush1.msra.mxu0 %v668
        %874 = vmatprep.subr.mxu0 %v671
        %875 = vmatpush1.msra.mxu0 %v670
        %876 = vmatprep.mubr.f32.mxu0 %v607
        %877 = vmatmul.mubr.f32.gmra.mrb[0].mxu0 %v606
        %v878 = vpop.f32.mrb[0].mxu0
        %v879 = vadd.f32 %v805, %v878
        %v880 = vpop.f32.mrb[0].mxu0
        %v881 = vadd.f32 %v809, %v880
        %882 = vdwg.mxu0
        %v883 = vld [vmem:[%s509] sm:$0x3]
        %v885 = vlaneseq
        %v886 = vshrl.u32 %v885, 7
        %v887 = vsub.s32 0, %v886
        %v888 = vrot.slane %v883, %v887
        %v889 = vlaneseq
        %v890 = vshrl.u32 %v889, 7
        %v891 = vsub.s32 1, %v890
        %v892 = vrot.slane %v883, %v891
        %895 = vmatprep.subr.mxu0 %v673
        %896 = vmatpush1.msra.mxu0 %v672
        %897 = vmatprep.subr.mxu0 %v675
        %898 = vmatpush1.msra.mxu0 %v674
        %899 = vmatprep.subr.mxu0 %v677
        %900 = vmatpush1.msra.mxu0 %v676
        %901 = vmatprep.subr.mxu0 %v679
        %902 = vmatpush1.msra.mxu0 %v678
        %903 = vmatprep.subr.mxu0 %v681
        %904 = vmatpush1.msra.mxu0 %v680
        %905 = vmatprep.subr.mxu0 %v683
        %906 = vmatpush1.msra.mxu0 %v682
        %907 = vmatprep.subr.mxu0 %v685
        %908 = vmatpush1.msra.mxu0 %v684
        %909 = vmatprep.subr.mxu0 %v687
        %910 = vmatpush1.msra.mxu0 %v686
        %911 = vmatprep.subr.mxu0 %v689
        %912 = vmatpush1.msra.mxu0 %v688
        %913 = vmatprep.subr.mxu0 %v691
        %914 = vmatpush1.msra.mxu0 %v690
        %915 = vmatprep.subr.mxu0 %v693
        %916 = vmatpush1.msra.mxu0 %v692
        %917 = vmatprep.subr.mxu0 %v695
        %918 = vmatpush1.msra.mxu0 %v694
        %919 = vmatprep.subr.mxu0 %v697
        %920 = vmatpush1.msra.mxu0 %v696
        %921 = vmatprep.subr.mxu0 %v699
        %922 = vmatpush1.msra.mxu0 %v698
        %923 = vmatprep.subr.mxu0 %v701
        %924 = vmatpush1.msra.mxu0 %v700
        %925 = vmatprep.subr.mxu0 %v703
        %926 = vmatpush1.msra.mxu0 %v702
        %927 = vmatprep.subr.mxu0 %v705
        %928 = vmatpush1.msra.mxu0 %v704
        %929 = vmatprep.subr.mxu0 %v707
        %930 = vmatpush1.msra.mxu0 %v706
        %931 = vmatprep.subr.mxu0 %v709
        %932 = vmatpush1.msra.mxu0 %v708
        %933 = vmatprep.subr.mxu0 %v711
        %934 = vmatpush1.msra.mxu0 %v710
        %935 = vmatprep.subr.mxu0 %v713
        %936 = vmatpush1.msra.mxu0 %v712
        %937 = vmatprep.subr.mxu0 %v715
        %938 = vmatpush1.msra.mxu0 %v714
        %939 = vmatprep.subr.mxu0 %v717
        %940 = vmatpush1.msra.mxu0 %v716
        %941 = vmatprep.subr.mxu0 %v719
        %942 = vmatpush1.msra.mxu0 %v718
        %943 = vmatprep.subr.mxu0 %v721
        %944 = vmatpush1.msra.mxu0 %v720
        %945 = vmatprep.subr.mxu0 %v723
        %946 = vmatpush1.msra.mxu0 %v722
        %947 = vmatprep.subr.mxu0 %v725
        %948 = vmatpush1.msra.mxu0 %v724
        %949 = vmatprep.subr.mxu0 %v727
        %950 = vmatpush1.msra.mxu0 %v726
        %951 = vmatprep.subr.mxu0 %v729
        %952 = vmatpush1.msra.mxu0 %v728
        %953 = vmatprep.subr.mxu0 %v731
        %954 = vmatpush1.msra.mxu0 %v730
        %955 = vmatprep.subr.mxu0 %v733
        %956 = vmatpush1.msra.mxu0 %v732
        %957 = vmatprep.subr.mxu0 %v735
        %958 = vmatpush1.msra.mxu0 %v734
        %959 = vmatprep.mubr.f32.mxu0 %v607
        %960 = vmatmul.mubr.f32.gmra.mrb[0].mxu0 %v606
        %v961 = vpop.f32.mrb[0].mxu0
        %v962 = vadd.f32 %v888, %v961
        %v963 = vpop.f32.mrb[0].mxu0
        %v964 = vadd.f32 %v892, %v963
        %965 = vdwg.mxu0
        %v966 = vsub.f32 0.0, %v879
        %v967 = vsub.f32 0.0, %v881
        %v968 = vmul.f32 %v966, 1.442695
        %v969 = vpow.pop %v968
        %v970 = vmul.f32 %v967, 1.442695
        %v971 = vpow.pop %v970
        %v972 = vadd.f32 %v969, 1.0
        %v973 = vadd.f32 %v971, 1.0
        %v974 = vrcp.pop %v972
        %v975 = vmul.f32 %v879, %v974
        %v976 = vrcp.pop %v973
        %v977 = vmul.f32 %v881, %v976
        %v978 = vmul.f32 %v975, %v962
        %v979 = vmul.f32 %v977, %v964
        %v980 = vld [vmem:[#allocation14] sm:$0xff]
        %v981 = vld [vmem:[#allocation14 + $0x8] sm:$0xff]
        %982 = vmatprep.subr.mxu0 %v737
        %983 = vmatpush1.msra.mxu0 %v736
        %984 = vmatprep.subr.mxu0 %v739
        %985 = vmatpush1.msra.mxu0 %v738
        %986 = vmatprep.subr.mxu0 %v741
        %987 = vmatpush1.msra.mxu0 %v740
        %988 = vmatprep.subr.mxu0 %v743
        %989 = vmatpush1.msra.mxu0 %v742
        %990 = vmatprep.subr.mxu0 %v745
        %991 = vmatpush1.msra.mxu0 %v744
        %992 = vmatprep.subr.mxu0 %v747
        %993 = vmatpush1.msra.mxu0 %v746
        %994 = vmatprep.subr.mxu0 %v749
        %995 = vmatpush1.msra.mxu0 %v748
        %996 = vmatprep.subr.mxu0 %v751
        %997 = vmatpush1.msra.mxu0 %v750
        %998 = vmatprep.subr.mxu0 %v753
        %999 = vmatpush1.msra.mxu0 %v752
        %1000 = vmatprep.subr.mxu0 %v755
        %1001 = vmatpush1.msra.mxu0 %v754
        %1002 = vmatprep.subr.mxu0 %v757
        %1003 = vmatpush1.msra.mxu0 %v756
        %1004 = vmatprep.subr.mxu0 %v759
        %1005 = vmatpush1.msra.mxu0 %v758
        %1006 = vmatprep.subr.mxu0 %v761
        %1007 = vmatpush1.msra.mxu0 %v760
        %1008 = vmatprep.subr.mxu0 %v763
        %1009 = vmatpush1.msra.mxu0 %v762
        %1010 = vmatprep.subr.mxu0 %v765
        %1011 = vmatpush1.msra.mxu0 %v764
        %1012 = vmatprep.subr.mxu0 %v767
        %1013 = vmatpush1.msra.mxu0 %v766
        %1014 = vmatprep.subr.mxu0 %v769
        %1015 = vmatpush1.msra.mxu0 %v768
        %1016 = vmatprep.subr.mxu0 %v771
        %1017 = vmatpush1.msra.mxu0 %v770
        %1018 = vmatprep.subr.mxu0 %v773
        %1019 = vmatpush1.msra.mxu0 %v772
        %1020 = vmatprep.subr.mxu0 %v775
        %1021 = vmatpush1.msra.mxu0 %v774
        %1022 = vmatprep.subr.mxu0 %v777
        %1023 = vmatpush1.msra.mxu0 %v776
        %1024 = vmatprep.subr.mxu0 %v779
        %1025 = vmatpush1.msra.mxu0 %v778
        %1026 = vmatprep.subr.mxu0 %v781
        %1027 = vmatpush1.msra.mxu0 %v780
        %1028 = vmatprep.subr.mxu0 %v783
        %1029 = vmatpush1.msra.mxu0 %v782
        %1030 = vmatprep.subr.mxu0 %v785
        %1031 = vmatpush1.msra.mxu0 %v784
        %1032 = vmatprep.subr.mxu0 %v787
        %1033 = vmatpush1.msra.mxu0 %v786
        %1034 = vmatprep.subr.mxu0 %v789
        %1035 = vmatpush1.msra.mxu0 %v788
        %1036 = vmatprep.subr.mxu0 %v791
        %1037 = vmatpush1.msra.mxu0 %v790
        %1038 = vmatprep.subr.mxu0 %v793
        %1039 = vmatpush1.msra.mxu0 %v792
        %1040 = vmatprep.subr.mxu0 %v795
        %1041 = vmatpush1.msra.mxu0 %v794
        %1042 = vmatprep.subr.mxu0 %v797
        %1043 = vmatpush1.msra.mxu0 %v796
        %1044 = vmatprep.subr.mxu0 %v799
        %1045 = vmatpush1.msra.mxu0 %v798
        %1046 = vmatprep.mubr.f32.mxu0 %v979
        %1047 = vmatmul.mubr.f32.gmra.mrb[0].mxu0 %v978
        %v1048 = vpop.f32.mrb[0].mxu0
        %v1049 = vadd.f32 0.0, %v1048
        %v1050 = vpop.f32.mrb[0].mxu0
        %v1051 = vadd.f32 0.0, %v1050
        %1052 = vdwg.mxu0
        %v1053 = vadd.f32 %v980, %v1049
        %v1054 = vadd.f32 %v981, %v1051
        %1055 = vst [vmem:[#allocation14] sm:$0xff] %v1053
        %1056 = vst [vmem:[#allocation14 + $0x8] sm:$0xff] %v1054
        %p1057 = scmp.eq.s32.totalorder %s36, 0
        %p1058 = pnand %p1057, %p599
        %p1059 = pneg %p1058
        // Predicated region
        $region81: #{simple_mlp_forward.1} parent=47 // pred_check
          _
        $region82: #{simple_mlp_forward.1} parent=47 // pred_check_branch
          %1061 = sbr.rel (%p1058) target = $region84
        $region83: #{simple_mlp_forward.1} parent=47 // pred_region
          %v1062 = vld [vmem:[#allocation14] sm:$0xff]
          %v1063 = vld [vmem:[#allocation14 + $0x8] sm:$0xff]
          %v1064 = vld [vmem:[%s527] sm:$0x3]
          %v1066 = vlaneseq
          %v1067 = vshrl.u32 %v1066, 7
          %v1068 = vsub.s32 0, %v1067
          %v1069 = vrot.slane %v1064, %v1068
          %v1070 = vlaneseq
          %v1071 = vshrl.u32 %v1070, 7
          %v1072 = vsub.s32 1, %v1071
          %v1073 = vrot.slane %v1064, %v1072
          %v1076 = vadd.f32 %v1062, %v1069
          %v1077 = vadd.f32 %v1063, %v1073
          %1078 = vst [vmem:[#allocation14] sm:$0xff] %v1076
          %1079 = vst [vmem:[#allocation14 + $0x8] sm:$0xff] %v1077
        $region84: #{simple_mlp_forward.1} parent=47 // pred_fallthru
          _
        // Predicated region
        $region85: #{simple_mlp_forward.1} parent=47 // pred_check
          %p1080 = pneg %p280
        $region86: #{simple_mlp_forward.1} parent=47 // pred_check_branch
          %1082 = sbr.rel (%p1080) target = $region88
        $region87: #{simple_mlp_forward.1} parent=47 // pred_region
          %s1084 = ssub.s32 256, 256
          %1085 = vsyncadd [#allocation4], %s1084
          %s1086 = smul.addr %s36, 2
          %s1087 = smul.addr %s1086, 128
          %s1088 = scalar_lea.hbm %s7, %s1087
          %s1090 = sshll.u32 [#allocation14], 4
          %s1091 = int_to_ptr.vmem [resolvable:$true] %s1090
          %1093 = dma.vmem_to_hbm [thread:$0]  %s1091, 256, %s1088, [#allocation4]
        $region88: #{simple_mlp_forward.1} parent=47 // pred_fallthru
          _
        // Predicated region
        $region89: #{simple_mlp_forward.1} parent=47 // pred_check
          %p1094 = pneg %p280
        $region90: #{simple_mlp_forward.1} parent=47 // pred_check_branch
          %1096 = sbr.rel (%p1094) target = $region92
        $region91: #{simple_mlp_forward.1} parent=47 // pred_region
          %1097 = dma.done [#allocation4], 256
        $region92: #{simple_mlp_forward.1} parent=47 // pred_fallthru
          _
      $region48: #{simple_mlp_forward.1} parent=5 // pred_fallthru
        _
      %p1098 = scmp.le.s32.totalorder 2, %s26
      // Predicated region
      $region93: #{simple_mlp_forward.1} parent=5 // pred_check
        %p1099 = pneg %p1098
      $region94: #{simple_mlp_forward.1} parent=5 // pred_check_branch
        %1101 = sbr.rel (%p1099) target = $region96
      $region95: #{simple_mlp_forward.1} parent=5 // pred_region
        %s1102 = ssub.s32 %s26, 2
      $region96: #{simple_mlp_forward.1} parent=5 // pred_fallthru
        _
    $region6: #{simple_mlp_forward.1} parent=1 // loop_footer
      %s30 = sadd.s32 1, %s26
    $region7: #{simple_mlp_forward.1} parent=1 // loop_footer_branch
      %25 = sbr.rel target = $region3
    $region8: #{simple_mlp_forward.1} parent=1 // loop_exit
      _
    %1103 = vsyncpa [#allocation3], 1
    %s1104 = scalar_lea.sflag [#allocation3], 1
    %1105 = vsyncpa %s1104, 1
    %1106 = vsyncpa [#allocation6], 1
    %s1107 = scalar_lea.sflag [#allocation6], 1
    %1108 = vsyncpa %s1107, 1
    %1109 = vsyncpa [#allocation9], 1
    %s1110 = scalar_lea.sflag [#allocation9], 1
    %1111 = vsyncpa %s1110, 1
    %1112 = vsyncpa [#allocation12], 1
    %s1113 = scalar_lea.sflag [#allocation12], 1
    %1114 = vsyncpa %s1113, 1
    %1115 = vsyncpa [#allocation4], 1
    %s1116 = scalar_lea.sflag [#allocation4], 1
    %1117 = vsyncpa %s1116, 1

</llo_original>
